<compile_context>
chip_gen: v6e
topology: v6e:2x2x1
jax: 0.10.0
libtpu: 0.0.40
codegen_flags: <defaults>
</compile_context>

<pallas_src>
import math
import functools

import numpy as np
import jax
import jax.numpy as jnp
from jax import lax
from jax.experimental import pallas as pl
from jax.experimental.pallas import tpu as pltpu


# -----------------------------------------------------------------------------
# positionalencoding2d — exact port of the PyTorch helper (setup-time glue).
# -----------------------------------------------------------------------------
def positionalencoding2d(d_model, height, width):
    if d_model % 4 != 0:
        raise ValueError(
            "Cannot use sin/cos positional encoding with odd dimension "
            "(got dim={:d})".format(d_model))
    pe = np.zeros((d_model, height, width), dtype=np.float32)
    d2 = d_model // 2
    div_term = np.exp(np.arange(0.0, d2, 2, dtype=np.float32)
                      * -(math.log(10000.0) / d2))
    pos_w = np.arange(0.0, width, dtype=np.float32)[:, None]
    pos_h = np.arange(0.0, height, dtype=np.float32)[:, None]
    pe[0:d2:2, :, :] = np.repeat(
        np.sin(pos_w * div_term).T[:, None, :], height, axis=1)
    pe[1:d2:2, :, :] = np.repeat(
        np.cos(pos_w * div_term).T[:, None, :], height, axis=1)
    pe[d2::2, :, :] = np.repeat(
        np.sin(pos_h * div_term).T[:, :, None], width, axis=2)
    pe[d2 + 1::2, :, :] = np.repeat(
        np.cos(pos_h * div_term).T[:, :, None], width, axis=2)
    return jnp.asarray(pe)


# -----------------------------------------------------------------------------
# Fused Pallas kernel: encoder -> user-sum -> powerNorm -> normalize -> decoder
# -----------------------------------------------------------------------------
def dmanet_fused_kernel(patches_ref, w_enc_ref, enc_bias_ref, w_dec_ref,
                        out_ref, *, num_users, rows_per_user, rows_per_image,
                        pn_scale_num):
    # ---- Encoder: ONE batched bf16 MXU matmul for all users ----------------
    # rows = (user, batch, h, w) patch locations; lanes = (padded) channels.
    feat = jnp.dot(patches_ref[...], w_enc_ref[...],
                   preferred_element_type=jnp.float32)          # (K*Bn, CP) f32
    cp = feat.shape[1]
    batch = rows_per_user // rows_per_image

    # ---- MSSV: reshape-sum over users (no serial add chain) + pre-summed ----
    # encoder label bias (sum_k(feat_k + bias_k) == sum_k feat_k + sum_k bias_k)
    summed = jnp.sum(feat.reshape(num_users, rows_per_user, cp), axis=0)
    summed = summed + enc_bias_ref[...]                          # (Bn, CP)

    # ---- powerNorm (per batch element) --------------------------------------
    # mod = sum(|s|^2) over the full flattened feature of that image (divide by
    # mod, NOT its sqrt), zero-guarded with where(mod==0, 1e-6) -- exactly the
    # reference powerNorm.  Reshape-reduce replaces the old group-matrix matmul.
    s3 = summed.reshape(batch, rows_per_image, cp)               # lanes intact
    mod = jnp.sum(jnp.sum(s3 * s3, axis=2, keepdims=True),
                  axis=1, keepdims=True)                         # (B, 1, 1)
    mod = jnp.where(mod == 0.0, jnp.float32(1e-6), mod)
    recv = s3 * (pl.reciprocal(mod, approx=True)
                 * jnp.float32(pn_scale_num))                    # EUP reciprocal

    # ---- F.normalize(p=2, dim=1): lanes are channels (padded lanes are 0) ---
    # x / max(||x||, 1e-12)  ==  x * rsqrt(max(sum(x^2), 1e-24))   (EUP rsqrt)
    sumsq = jnp.sum(recv * recv, axis=-1, keepdims=True)
    xn = recv * lax.rsqrt(jnp.maximum(sumsq, jnp.float32(1e-24)))

    # ---- Decoder base: user-invariant matmul done exactly ONCE --------------
    # The per-user decoder label bias is added in the XLA unpatchify epilogue
    # (cuts kernel HBM writeback by K x).
    xn2 = xn.reshape(rows_per_user, cp).astype(w_dec_ref.dtype)
    out_ref[...] = jnp.dot(xn2, w_dec_ref[...],
                           preferred_element_type=jnp.float32)   # (Bn, DP) f32


def run_dmanet_fused(patches, w_enc_pad, enc_bias_sum, w_dec_pad, *,
                     num_users, rows_per_user, rows_per_image, pn_scale_num):
    n_rows = num_users * rows_per_user
    pin, enc_pad = w_enc_pad.shape
    dec_pad = w_dec_pad.shape[1]
    kernel = functools.partial(
        dmanet_fused_kernel,
        num_users=num_users,
        rows_per_user=rows_per_user,
        rows_per_image=rows_per_image,
        pn_scale_num=float(pn_scale_num))
    vmem = lambda: pl.BlockSpec(memory_space=pltpu.MemorySpace.VMEM)
    cost = pl.CostEstimate(
        flops=(2 * n_rows * pin * enc_pad
               + 2 * rows_per_user * enc_pad * dec_pad),
        transcendentals=rows_per_user + rows_per_user // rows_per_image,
        bytes_accessed=(patches.size * patches.dtype.itemsize
                        + w_enc_pad.size * 2
                        + enc_bias_sum.size * 4
                        + w_dec_pad.size * 2
                        + rows_per_user * dec_pad * 4))
    # Gridless: whole problem fits comfortably in VMEM at these shapes.
    # TODO(synk): when scaling rows, add a "parallel" grid over the image axis
    # (powerNorm/normalize are per-image) so both v7x TensorCores run; use row
    # tiles >= 512 and keep the double-buffered budget <= ~48 MiB on v7x
    # (64 MiB VMEM) and up to ~96-100 MiB on v5e/v6e (128 MiB VMEM).
    return pl.pallas_call(
        kernel,
        out_shape=jax.ShapeDtypeStruct((rows_per_user, dec_pad), jnp.float32),
        in_specs=[vmem() for _ in range(4)],
        out_specs=vmem(),
        cost_estimate=cost,
        compiler_params=pltpu.CompilerParams(
            vmem_limit_bytes=32 * 1024 * 1024),
    )(patches, w_enc_pad, enc_bias_sum, w_dec_pad)


# -----------------------------------------------------------------------------
# Jitted forward core: patchify -> fused kernel -> unpatchify (+ per-user bias)
# -----------------------------------------------------------------------------
def _patchify_batch(imgs, p):
    # imgs: (K, B, C, H, W) -> (K*B*hp*wp, C*p*p), rows ordered (k, b, h, w)
    K, B, C, H, W = imgs.shape
    x = imgs.reshape(K, B, C, H // p, p, W // p, p)
    x = x.transpose(0, 1, 3, 5, 2, 4, 6)
    return x.reshape(K * B * (H // p) * (W // p), C * p * p)


def _forward_core(imgs, labels, w_enc_pad, wl_enc, b_enc, w_dec_pad, wl_dec,
                  b_dec, *, P, cch, patch):
    K, B, C_in, H, W = imgs.shape
    hp = H // patch
    rows_per_image = hp * hp
    rows_per_user = B * rows_per_image
    dec_out = wl_dec.shape[1]            # C_in * patch * patch
    enc_pad = w_enc_pad.shape[1]         # 128

    # NOTE: rows_per_user should be a multiple of 8 for clean sublane layouts
    # in the in-kernel reshapes (true for the shapes used here).
    patches = _patchify_batch(imgs, patch).astype(jnp.bfloat16)

    # Per-user label biases: (K,256)x(256,N) done once here, NOT in the kernel.
    enc_b = labels @ wl_enc + b_enc                      # (K, cch)
    dec_b = labels @ wl_dec + b_dec                      # (K, dec_out)
    # Pre-sum encoder biases over users (single (1, 128) row for the kernel).
    enc_bias_sum = jnp.zeros((1, enc_pad), jnp.float32).at[:, :cch].set(
        jnp.sum(enc_b, axis=0, keepdims=True))

    l_half = (cch * rows_per_image) // 2                 # complex feature len
    pn_scale_num = math.sqrt(P * l_half)                 # sqrt(weight)

    base = run_dmanet_fused(
        patches, w_enc_pad, enc_bias_sum, w_dec_pad,
        num_users=K, rows_per_user=rows_per_user,
        rows_per_image=rows_per_image, pn_scale_num=pn_scale_num)

    base = base[:, :dec_out]                             # drop lane padding
    # Per-user decoder label bias folded into the unpatchify epilogue (fuses).
    rows = base[None, :, :] + dec_b[:, None, :]          # (K, Bn, dec_out)
    # unpatchify: (K, B*hp*hp, C_in*p*p) -> (K, B, C_in, H, W)
    y = rows.reshape(K, B, hp, hp, C_in, patch, patch)
    y = y.transpose(0, 1, 4, 2, 5, 3, 6)
    return y.reshape(K, B, C_in, H, W)


# -----------------------------------------------------------------------------
# DMANet
# -----------------------------------------------------------------------------
class DMANetPallas:
    def __init__(self, envs, img_size=16, compressed_channel=8, P=1,
                 CSI_bound=4, seed=0):
        self.P = P
        self.img_size = img_size
        self.compressed_channel = compressed_channel
        self.CSI_bound = CSI_bound
        self.patch = 8
        self.envs = [jnp.asarray(h, dtype=jnp.complex64) for h in envs]
        self.PE = positionalencoding2d(256, 2 * CSI_bound, 2 * CSI_bound)

        key = jax.random.PRNGKey(seed)
        ks = jax.random.split(key, 7)
        c = compressed_channel
        pin = 3 * self.patch * self.patch  # 192
        W_enc = 0.05 * jax.random.normal(ks[0], (pin, c), jnp.float32)
        self.Wl_enc = 0.05 * jax.random.normal(ks[1], (256, c), jnp.float32)
        self.b_enc = 0.05 * jax.random.normal(ks[2], (1, c), jnp.float32)
        W_dec = 0.05 * jax.random.normal(ks[3], (c, pin), jnp.float32)
        self.Wl_dec = 0.05 * jax.random.normal(ks[4], (256, pin), jnp.float32)
        self.b_dec = 0.05 * jax.random.normal(ks[5], (1, pin), jnp.float32)
        self.shared_phi = 2 * 3.14 * jax.random.uniform(
            ks[6], (envs[0].shape[0],), jnp.float32)

        # Zero-padded bf16 matmul weights (lane-dense kernel tiles; padded
        # columns/rows are exactly zero so in-kernel lane sums stay exact).
        enc_pad = max(128, ((c + 127) // 128) * 128)
        dec_pad = ((pin + 127) // 128) * 128
        self.W_enc_pad = (jnp.zeros((pin, enc_pad), jnp.bfloat16)
                          .at[:, :c].set(W_enc.astype(jnp.bfloat16)))
        self.W_dec_pad = (jnp.zeros((enc_pad, dec_pad), jnp.bfloat16)
                          .at[:c, :pin].set(W_dec.astype(jnp.bfloat16)))

        self._core = jax.jit(functools.partial(
            _forward_core, P=P, cch=c, patch=self.patch))

    def _label(self, key_str):
        real, imag = key_str.split('-')
        w = int(np.clip(round(float(real)) + self.CSI_bound,
                        0, 2 * self.CSI_bound - 1))
        h = int(np.clip(round(float(imag)) + self.CSI_bound,
                        0, 2 * self.CSI_bound - 1))
        return self.PE[:, w, h].reshape(1, 256)          # (1, 256)

    def forward(self, schedule_list):
        # Psi is computed in the reference forward but unused downstream.
        _psi = jnp.cos(self.shared_phi) + 1j * jnp.sin(self.shared_phi)

        keys = list(schedule_list.keys())
        labels = jnp.concatenate([self._label(k) for k in keys], axis=0)
        imgs = jnp.stack([schedule_list[k] for k in keys], axis=0)

        out = self._core(imgs, labels, self.W_enc_pad, self.Wl_enc, self.b_enc,
                         self.W_dec_pad, self.Wl_dec, self.b_dec)
        return {k: out[i] for i, k in enumerate(keys)}


# -----------------------------------------------------------------------------
if __name__ == "__main__":
    B = 2
    IMG = 16
    CCH = 8
    CSI_BOUND = 4

    key = jax.random.PRNGKey(0)
    k1, k2, k3, k4 = jax.random.split(key, 4)

    # Small synthetic Rician-like environments (complex), matching envs usage.
    envs = [
        (jax.random.normal(k3, (6, 4)) + 1j * jax.random.normal(k4, (6, 4))),
        (jax.random.normal(k4, (6, 4)) + 1j * jax.random.normal(k3, (6, 4))),
    ]

    net = DMANetPallas(envs, img_size=IMG, compressed_channel=CCH,
                       P=1, CSI_bound=CSI_BOUND, seed=0)

    schedule_list = {
        "1-2": jax.random.normal(k1, (B, 3, IMG, IMG), jnp.float32),
        "2-3": jax.random.normal(k2, (B, 3, IMG, IMG), jnp.float32),
    }

    out = net.forward(schedule_list)
    for k, v in out.items():
        jax.block_until_ready(v)
        assert v.shape == (B, 3, IMG, IMG), v.shape
        assert v.dtype == jnp.float32
        assert bool(jnp.all(jnp.isfinite(v)))
    print("KERNEL_OK")
</pallas_src>

<mosaic_0001>
module attributes {stable_mosaic.version = 11 : i64} {
  func.func @dmanet_fused_kernel(%arg0: memref<16x192xbf16, #tpu.memory_space<vmem>>, %arg1: memref<192x128xbf16, #tpu.memory_space<vmem>>, %arg2: memref<1x128xf32, #tpu.memory_space<vmem>>, %arg3: memref<128x256xbf16, #tpu.memory_space<vmem>>, %arg4: memref<8x256xf32, #tpu.memory_space<vmem>>) attributes {dimension_semantics = [], scalar_prefetch = 0 : i64, scratch_operands = 0 : i64, tpu.core_type = #tpu.core_type<tc>} {
    %c0 = arith.constant 0 : index
    %c0_0 = arith.constant 0 : index
    %0 = vector.load %arg0[%c0, %c0_0] : memref<16x192xbf16, #tpu.memory_space<vmem>>, vector<16x192xbf16>
    %c0_1 = arith.constant 0 : index
    %c0_2 = arith.constant 0 : index
    %1 = vector.load %arg1[%c0_1, %c0_2] : memref<192x128xbf16, #tpu.memory_space<vmem>>, vector<192x128xbf16>
    %cst = arith.constant dense<0.000000e+00> : vector<16x128xf32>
    %2 = tpu.matmul %0, %1, %cst {dimension_numbers = #tpu.dot_dimension_numbers<[1], [0], [0], [1], [0, 0, 1, 1], [], []>} : vector<16x192xbf16>, vector<192x128xbf16>, vector<16x128xf32> -> vector<16x128xf32>
    %3 = vector.shape_cast %2 : vector<16x128xf32> to vector<2x8x128xf32>
    %cst_3 = arith.constant dense<0.000000e+00> : vector<8x128xf32>
    %4 = vector.multi_reduction <add>, %3, %cst_3 [0] : vector<2x8x128xf32> to vector<8x128xf32>
    %c0_4 = arith.constant 0 : index
    %c0_5 = arith.constant 0 : index
    %5 = vector.load %arg2[%c0_4, %c0_5] : memref<1x128xf32, #tpu.memory_space<vmem>>, vector<1x128xf32>
    %6 = vector.broadcast %5 : vector<1x128xf32> to vector<8x128xf32>
    %7 = arith.addf %4, %6 : vector<8x128xf32>
    %8 = vector.shape_cast %7 : vector<8x128xf32> to vector<2x4x128xf32>
    %9 = arith.mulf %8, %8 : vector<2x4x128xf32>
    %cst_6 = arith.constant dense<0.000000e+00> : vector<2x4xf32>
    %10 = vector.multi_reduction <add>, %9, %cst_6 [2] : vector<2x4x128xf32> to vector<2x4xf32>
    %11 = vector.shape_cast %10 : vector<2x4xf32> to vector<2x4x1xf32>
    %cst_7 = arith.constant dense<0.000000e+00> : vector<2x1xf32>
    %12 = vector.multi_reduction <add>, %11, %cst_7 [1] : vector<2x4x1xf32> to vector<2x1xf32>
    %13 = vector.shape_cast %12 : vector<2x1xf32> to vector<2x1x1xf32>
    %cst_8 = arith.constant 0.000000e+00 : f32
    %14 = vector.broadcast %cst_8 : f32 to vector<2x1x1xf32>
    %15 = arith.cmpf oeq, %13, %14 : vector<2x1x1xf32>
    %cst_9 = arith.constant 9.99999997E-7 : f32
    %16 = vector.broadcast %cst_9 : f32 to vector<2x1x1xf32>
    %17 = arith.select %15, %16, %13 : vector<2x1x1xi1>, vector<2x1x1xf32>
    %18 = tpu.reciprocal %17 {approx = true} : vector<2x1x1xf32> -> vector<2x1x1xf32>
    %cst_10 = arith.constant 4.000000e+00 : f32
    %19 = vector.broadcast %cst_10 : f32 to vector<2x1x1xf32>
    %20 = arith.mulf %18, %19 : vector<2x1x1xf32>
    %21 = vector.broadcast %20 : vector<2x1x1xf32> to vector<2x4x128xf32>
    %22 = arith.mulf %8, %21 : vector<2x4x128xf32>
    %23 = arith.mulf %22, %22 : vector<2x4x128xf32>
    %cst_11 = arith.constant dense<0.000000e+00> : vector<2x4xf32>
    %24 = vector.multi_reduction <add>, %23, %cst_11 [2] : vector<2x4x128xf32> to vector<2x4xf32>
    %25 = vector.shape_cast %24 : vector<2x4xf32> to vector<2x4x1xf32>
    %cst_12 = arith.constant 1.000000e-24 : f32
    %26 = vector.broadcast %cst_12 : f32 to vector<2x4x1xf32>
    %27 = arith.maximumf %25, %26 : vector<2x4x1xf32>
    %28 = math.rsqrt %27 : vector<2x4x1xf32>
    %29 = vector.broadcast %28 : vector<2x4x1xf32> to vector<2x4x128xf32>
    %30 = arith.mulf %22, %29 : vector<2x4x128xf32>
    %31 = vector.shape_cast %30 : vector<2x4x128xf32> to vector<8x128xf32>
    %32 = arith.truncf %31 : vector<8x128xf32> to vector<8x128xbf16>
    %c0_13 = arith.constant 0 : index
    %c0_14 = arith.constant 0 : index
    %33 = vector.load %arg3[%c0_13, %c0_14] : memref<128x256xbf16, #tpu.memory_space<vmem>>, vector<128x256xbf16>
    %cst_15 = arith.constant dense<0.000000e+00> : vector<8x256xf32>
    %34 = tpu.matmul %32, %33, %cst_15 {dimension_numbers = #tpu.dot_dimension_numbers<[1], [0], [0], [1], [0, 0, 1, 1], [], []>} : vector<8x128xbf16>, vector<128x256xbf16>, vector<8x256xf32> -> vector<8x256xf32>
    %c0_16 = arith.constant 0 : index
    %c0_17 = arith.constant 0 : index
    %35 = vector.load %arg4[%c0_16, %c0_17] : memref<8x256xf32, #tpu.memory_space<vmem>>, vector<8x256xf32>
    tpu.vector_store %arg4[%c0_16, %c0_17], %34 {strides = array<i32>} : memref<8x256xf32, #tpu.memory_space<vmem>>, vector<8x256xf32>,
    return
  }
}

</mosaic_0001>

<llo_original>
// kernel: _forward_core.1
$region0: #{_forward_core.1}
  #allocation0 [shape = 'u32[]', space=smem, size = 0x4, offset = 0x4, fixed_abs, tag = 'smem constant byte address 0x4 - core index']
  #allocation1 [shape = 'u32[144,128]{1,0:T(1,128)}', space=vmem, size = 0x12000, scoped, tag = 'internal scratch']
  %s0 = inlined_call_operand.vmem [shape: bf16[16,192], index: 0, kind: input, shape index: {}]
  %s1 = inlined_call_operand.vmem [shape: bf16[192,128], index: 1, kind: input, shape index: {}]
  %s2 = inlined_call_operand.vmem [shape: f32[1,128], index: 2, kind: input, shape index: {}]
  %s3 = inlined_call_operand.vmem [shape: bf16[128,256], index: 3, kind: input, shape index: {}]
  %s4 = inlined_call_operand.vmem [shape: f32[8,256], index: 4, kind: output, shape index: {}]
  %s5 = sld [smem:[#allocation0]]
  $region26: #{_forward_core.1} parent=0
    _
  %s7 = ssub.s32 1, %s5
  %s8 = scalar_select 0, %s7, %s5
  // Predicated region
  $region2: #{_forward_core.1} parent=0 // pred_check
    _
  $region3: #{_forward_core.1} parent=0 // pred_check_branch
    %10 = sbr.rel (0) target = $region5
  $region4: #{_forward_core.1} parent=0 // pred_region
    _
  $region5: #{_forward_core.1} parent=0 // pred_fallthru
    _
  // Predicated region
  $region6: #{_forward_core.1} parent=0 // pred_check
    _
  $region7: #{_forward_core.1} parent=0 // pred_check_branch
    %12 = sbr.rel (0) target = $region9
  $region8: #{_forward_core.1} parent=0 // pred_region
    _
  $region9: #{_forward_core.1} parent=0 // pred_fallthru
    _
  // Predicated region
  $region10: #{_forward_core.1} parent=0 // pred_check
    _
  $region11: #{_forward_core.1} parent=0 // pred_check_branch
    %14 = sbr.rel (0) target = $region13
  $region12: #{_forward_core.1} parent=0 // pred_region
    _
  $region13: #{_forward_core.1} parent=0 // pred_fallthru
    _
  // Predicated region
  $region14: #{_forward_core.1} parent=0 // pred_check
    _
  $region15: #{_forward_core.1} parent=0 // pred_check_branch
    %16 = sbr.rel (0) target = $region17
  $region16: #{_forward_core.1} parent=0 // pred_region
    _
  $region17: #{_forward_core.1} parent=0 // pred_fallthru
    _
  %v18 = vld [vmem:[%s0] sm:$0xff]
  %v19 = vld [vmem:[%s0 + $0x8] sm:$0xff]
  %v20 = vld [vmem:[%s1] sm:$0xf]
  %v21 = vld [vmem:[%s1 + $0x4] sm:$0xf]
  %v22 = vld [vmem:[%s1 + $0x8] sm:$0xf]
  %v23 = vld [vmem:[%s1 + $0xc] sm:$0xf]
  %v24 = vld [vmem:[%s1 + $0x10] sm:$0xf]
  %v25 = vld [vmem:[%s1 + $0x14] sm:$0xf]
  %v26 = vld [vmem:[%s1 + $0x18] sm:$0xf]
  %v27 = vld [vmem:[%s1 + $0x1c] sm:$0xf]
  %v28 = vld [vmem:[%s1 + $0x20] sm:$0xf]
  %v29 = vld [vmem:[%s1 + $0x24] sm:$0xf]
  %v30 = vld [vmem:[%s1 + $0x28] sm:$0xf]
  %v31 = vld [vmem:[%s1 + $0x2c] sm:$0xf]
  %v32 = vld [vmem:[%s1 + $0x30] sm:$0xf]
  %v33 = vld [vmem:[%s1 + $0x34] sm:$0xf]
  %v34 = vld [vmem:[%s1 + $0x38] sm:$0xf]
  %v35 = vld [vmem:[%s1 + $0x3c] sm:$0xf]
  %v36 = vld [vmem:[%s1 + $0x40] sm:$0xf]
  %v37 = vld [vmem:[%s1 + $0x44] sm:$0xf]
  %v38 = vld [vmem:[%s1 + $0x48] sm:$0xf]
  %v39 = vld [vmem:[%s1 + $0x4c] sm:$0xf]
  %v40 = vld [vmem:[%s1 + $0x50] sm:$0xf]
  %v41 = vld [vmem:[%s1 + $0x54] sm:$0xf]
  %v42 = vld [vmem:[%s1 + $0x58] sm:$0xf]
  %v43 = vld [vmem:[%s1 + $0x5c] sm:$0xf]
  %v46 = vunpack.c.l.b16 %v18
  %v47 = vunpack.c.h.b16 %v18
  %v48 = vunpack.c.l.b16 %v19
  %v49 = vunpack.c.h.b16 %v19
  %v50 = vpack.c.b16 %v48, %v46
  %v51 = vpack.c.b16 %v49, %v47
  %v77 = vunpack.c.l.b16 %v20
  %v78 = vunpack.c.l.b16 %v21
  %v79 = vunpack.c.l.b16 %v22
  %v80 = vunpack.c.l.b16 %v23
  %v81 = vunpack.c.l.b16 %v24
  %v82 = vunpack.c.l.b16 %v25
  %v83 = vunpack.c.l.b16 %v26
  %v84 = vunpack.c.l.b16 %v27
  %v85 = vunpack.c.l.b16 %v28
  %v86 = vunpack.c.l.b16 %v29
  %v87 = vunpack.c.l.b16 %v30
  %v88 = vunpack.c.l.b16 %v31
  %v89 = vunpack.c.l.b16 %v32
  %v90 = vunpack.c.l.b16 %v33
  %v91 = vunpack.c.l.b16 %v34
  %v92 = vunpack.c.l.b16 %v35
  %v93 = vunpack.c.l.b16 %v36
  %v94 = vunpack.c.l.b16 %v37
  %v95 = vunpack.c.l.b16 %v38
  %v96 = vunpack.c.l.b16 %v39
  %v97 = vunpack.c.l.b16 %v40
  %v98 = vunpack.c.l.b16 %v41
  %v99 = vunpack.c.l.b16 %v42
  %v100 = vunpack.c.l.b16 %v43
  %v101 = vpack.c.b16 %v78, %v77
  %v102 = vpack.c.b16 %v80, %v79
  %v103 = vpack.c.b16 %v82, %v81
  %v104 = vpack.c.b16 %v84, %v83
  %v105 = vpack.c.b16 %v86, %v85
  %v106 = vpack.c.b16 %v88, %v87
  %v107 = vpack.c.b16 %v90, %v89
  %v108 = vpack.c.b16 %v92, %v91
  %v109 = vpack.c.b16 %v94, %v93
  %v110 = vpack.c.b16 %v96, %v95
  %v111 = vpack.c.b16 %v98, %v97
  %v112 = vpack.c.b16 %v100, %v99
  %vm125 = vcmask 523264
  %v127 = vsel %vm125, %v51, 0
  %129 = vmatprep.subr.bf16.mxu0 0
  %130 = vmatpush1.bf16.msra.mxu0 %v108
  %131 = vmatprep.subr.bf16.mxu0 0
  %132 = vmatpush1.bf16.msra.mxu0 %v107
  %133 = vmatprep.subr.bf16.mxu0 0
  %134 = vmatpush1.bf16.msra.mxu0 %v106
  %135 = vmatprep.subr.bf16.mxu0 0
  %136 = vmatpush1.bf16.msra.mxu0 %v105
  %137 = vmatprep.subr.bf16.mxu0 0
  %138 = vmatpush1.bf16.msra.mxu0 %v104
  %139 = vmatprep.subr.bf16.mxu0 0
  %140 = vmatpush1.bf16.msra.mxu0 %v103
  %141 = vmatprep.subr.bf16.mxu0 0
  %142 = vmatpush1.bf16.msra.mxu0 %v102
  %143 = vmatprep.subr.bf16.mxu0 0
  %144 = vmatpush1.bf16.msra.mxu0 %v101
  %145 = vmatprep.subr.bf16.mxu0 0
  %146 = vmatpush2.bf16.msra.mxu0 0
  %147 = vmatprep.subr.bf16.mxu0 0
  %148 = vmatpush2.bf16.msra.mxu0 0
  %149 = vmatprep.subr.bf16.mxu0 0
  %150 = vmatpush2.bf16.msra.mxu0 0
  %151 = vmatprep.subr.bf16.mxu0 0
  %152 = vmatpush2.bf16.msra.mxu0 0
  %153 = vmatprep.subr.bf16.mxu0 0
  %154 = vmatpush2.bf16.msra.mxu0 %v112
  %155 = vmatprep.subr.bf16.mxu0 0
  %156 = vmatpush2.bf16.msra.mxu0 %v111
  %157 = vmatprep.subr.bf16.mxu0 0
  %158 = vmatpush2.bf16.msra.mxu0 %v110
  %159 = vmatprep.subr.bf16.mxu0 0
  %160 = vmatpush2.bf16.msra.mxu0 %v109
  %161 = vmatprep.mubr.bf16.mxu0 %v127
  %162 = vmatmul.mubr.bf16.gmra.mxu0 %v50
  %v163 = vpop.f32.mrf.mxu0
  %v164 = vadd.f32 0.0, %v163
  %v165 = vpop.f32.mrf.mxu0
  %v166 = vpop.f32.mrf.mxu0
  %v167 = vadd.f32 0.0, %v166
  %v168 = vpop.f32.mrf.mxu0
  %169 = vdwg.mxu0
  %v170 = vadd.f32 %v164, %v167
  %v171 = vld [vmem:[%s2] sm:$0x1]
  %v173 = vlaneseq
  %v174 = vshrl.u32 %v173, 7
  %v175 = vsub.s32 0, %v174
  %v176 = vrot.slane %v171, %v175
  %v178 = vadd.f32 %v170, %v176
  %v180 = vcombine.high %v178, %v178
  %v182 = vmul.f32 %v178, %v178
  %v183 = vmul.f32 %v180, %v180
  %vm184 = vcmask 1043456
  %v185 = vsel %vm184, %v182, 0.0
  %186 = vadd.xlane.f32.xlu0 %v185
  %v187 = vpop.xlane.xlu0 %186
  %v188 = vsel %vm184, %v183, 0.0
  %189 = vadd.xlane.f32.xlu0 %v188
  %v190 = vpop.xlane.xlu0 %189
  %v191 = vsel %vm184, %v187, 0.0
  %v192 = vrot.slane %v191, 4
  %v193 = vadd.f32 %v191, %v192
  %v194 = vrot.slane %v193, 2
  %v195 = vadd.f32 %v193, %v194
  %v196 = vrot.slane %v195, 1
  %v197 = vadd.f32 %v195, %v196
  %v198 = vsel %vm184, %v190, 0.0
  %v199 = vrot.slane %v198, 4
  %v200 = vadd.f32 %v198, %v199
  %v201 = vrot.slane %v200, 2
  %v202 = vadd.f32 %v200, %v201
  %v203 = vrot.slane %v202, 1
  %v204 = vadd.f32 %v202, %v203
  %vm205 = vcmp.eq.f32.partialorder %v197, 0.0
  %vm206 = vcmp.eq.f32.partialorder %v204, 0.0
  %v207 = vsel %vm205, 1e-06, %v197
  %v208 = vsel %vm206, 1e-06, %v204
  %v209 = vrcp.pop %v207
  %v210 = vrcp.pop %v208
  %v211 = vmul.f32 %v209, 4.0
  %v212 = vmul.f32 %v210, 4.0
  %v213 = vmul.f32 %v178, %v211
  %v214 = vmul.f32 %v180, %v212
  %v215 = vmul.f32 %v213, %v213
  %v216 = vmul.f32 %v214, %v214
  %v217 = vsel %vm184, %v215, 0.0
  %218 = vadd.xlane.f32.xlu0 %v217
  %v219 = vpop.xlane.xlu0 %218
  %v220 = vsel %vm184, %v216, 0.0
  %221 = vadd.xlane.f32.xlu0 %v220
  %v222 = vpop.xlane.xlu0 %221
  %v223 = vmax.f32 %v219, 1e-24
  %v224 = vmax.f32 %v222, 1e-24
  %v225 = vrsqrt.pop %v223
  %v226 = vrsqrt.pop %v224
  %v227 = vmul.f32 %v213, %v225
  %v228 = vmul.f32 %v214, %v226
  %v231 = vcombine.low %v227, %v228
  %v233 = vpack.c.bf16 %v231, %v231
  %v234 = vld [vmem:[%s3] sm:$0xff]
  %v235 = vld [vmem:[%s3 + $0x8] sm:$0xff]
  %v236 = vld [vmem:[%s3 + $0x10] sm:$0xff]
  %v237 = vld [vmem:[%s3 + $0x18] sm:$0xff]
  %v238 = vld [vmem:[%s3 + $0x20] sm:$0xff]
  %v239 = vld [vmem:[%s3 + $0x28] sm:$0xff]
  %v240 = vld [vmem:[%s3 + $0x30] sm:$0xff]
  %v241 = vld [vmem:[%s3 + $0x38] sm:$0xff]
  %v242 = vld [vmem:[%s3 + $0x40] sm:$0xff]
  %v243 = vld [vmem:[%s3 + $0x48] sm:$0xff]
  %v244 = vld [vmem:[%s3 + $0x50] sm:$0xff]
  %v245 = vld [vmem:[%s3 + $0x58] sm:$0xff]
  %v246 = vld [vmem:[%s3 + $0x60] sm:$0xff]
  %v247 = vld [vmem:[%s3 + $0x68] sm:$0xff]
  %v248 = vld [vmem:[%s3 + $0x70] sm:$0xff]
  %v249 = vld [vmem:[%s3 + $0x78] sm:$0xff]
  %v266 = vunpack.c.l.b16 %v234
  %v267 = vunpack.c.h.b16 %v234
  %v268 = vunpack.c.l.b16 %v235
  %v269 = vunpack.c.h.b16 %v235
  %v270 = vunpack.c.l.b16 %v236
  %v271 = vunpack.c.h.b16 %v236
  %v272 = vunpack.c.l.b16 %v237
  %v273 = vunpack.c.h.b16 %v237
  %v274 = vunpack.c.l.b16 %v238
  %v275 = vunpack.c.h.b16 %v238
  %v276 = vunpack.c.l.b16 %v239
  %v277 = vunpack.c.h.b16 %v239
  %v278 = vunpack.c.l.b16 %v240
  %v279 = vunpack.c.h.b16 %v240
  %v280 = vunpack.c.l.b16 %v241
  %v281 = vunpack.c.h.b16 %v241
  %v282 = vunpack.c.l.b16 %v242
  %v283 = vunpack.c.h.b16 %v242
  %v284 = vunpack.c.l.b16 %v243
  %v285 = vunpack.c.h.b16 %v243
  %v286 = vunpack.c.l.b16 %v244
  %v287 = vunpack.c.h.b16 %v244
  %v288 = vunpack.c.l.b16 %v245
  %v289 = vunpack.c.h.b16 %v245
  %v290 = vunpack.c.l.b16 %v246
  %v291 = vunpack.c.h.b16 %v246
  %v292 = vunpack.c.l.b16 %v247
  %v293 = vunpack.c.h.b16 %v247
  %v294 = vunpack.c.l.b16 %v248
  %v295 = vunpack.c.h.b16 %v248
  %v296 = vunpack.c.l.b16 %v249
  %v297 = vunpack.c.h.b16 %v249
  %v298 = vpack.c.b16 %v268, %v266
  %v299 = vpack.c.b16 %v269, %v267
  %v300 = vpack.c.b16 %v272, %v270
  %v301 = vpack.c.b16 %v273, %v271
  %v302 = vpack.c.b16 %v276, %v274
  %v303 = vpack.c.b16 %v277, %v275
  %v304 = vpack.c.b16 %v280, %v278
  %v305 = vpack.c.b16 %v281, %v279
  %v306 = vpack.c.b16 %v284, %v282
  %v307 = vpack.c.b16 %v285, %v283
  %v308 = vpack.c.b16 %v288, %v286
  %v309 = vpack.c.b16 %v289, %v287
  %v310 = vpack.c.b16 %v292, %v290
  %v311 = vpack.c.b16 %v293, %v291
  %v312 = vpack.c.b16 %v296, %v294
  %v313 = vpack.c.b16 %v297, %v295
  %330 = vmatprep.subr.bf16.mxu0 %v313
  %331 = vmatpush1.bf16.msra.mxu0 %v312
  %332 = vmatprep.subr.bf16.mxu0 %v311
  %333 = vmatpush1.bf16.msra.mxu0 %v310
  %334 = vmatprep.subr.bf16.mxu0 %v309
  %335 = vmatpush1.bf16.msra.mxu0 %v308
  %336 = vmatprep.subr.bf16.mxu0 %v307
  %337 = vmatpush1.bf16.msra.mxu0 %v306
  %338 = vmatprep.subr.bf16.mxu0 %v305
  %339 = vmatpush1.bf16.msra.mxu0 %v304
  %340 = vmatprep.subr.bf16.mxu0 %v303
  %341 = vmatpush1.bf16.msra.mxu0 %v302
  %342 = vmatprep.subr.bf16.mxu0 %v301
  %343 = vmatpush1.bf16.msra.mxu0 %v300
  %344 = vmatprep.subr.bf16.mxu0 %v299
  %345 = vmatpush1.bf16.msra.mxu0 %v298
  %346 = vmatprep.subr.bf16.mxu0 0
  %347 = vmatpush2.bf16.msra.mxu0 0
  %348 = vmatprep.subr.bf16.mxu0 0
  %349 = vmatpush2.bf16.msra.mxu0 0
  %350 = vmatprep.subr.bf16.mxu0 0
  %351 = vmatpush2.bf16.msra.mxu0 0
  %352 = vmatprep.subr.bf16.mxu0 0
  %353 = vmatpush2.bf16.msra.mxu0 0
  %354 = vmatprep.subr.bf16.mxu0 0
  %355 = vmatpush2.bf16.msra.mxu0 0
  %356 = vmatprep.subr.bf16.mxu0 0
  %357 = vmatpush2.bf16.msra.mxu0 0
  %358 = vmatprep.subr.bf16.mxu0 0
  %359 = vmatpush2.bf16.msra.mxu0 0
  %360 = vmatprep.subr.bf16.mxu0 0
  %361 = vmatpush2.bf16.msra.mxu0 0
  %362 = vmatprep.mubr.bf16.mxu0 0
  %363 = vmatmul.mubr.bf16.gmra.mxu0 %v233
  %v364 = vpop.f32.mrf.mxu0
  %v365 = vadd.f32 0.0, %v364
  %v366 = vpop.f32.mrf.mxu0
  %v367 = vadd.f32 0.0, %v366
  %v368 = vpop.f32.mrf.mxu0
  %v369 = vpop.f32.mrf.mxu0
  %370 = vdwg.mxu0
  %371 = vst [vmem:[%s4] sm:$0xff] %v365
  %372 = vst [vmem:[%s4 + $0x8] sm:$0xff] %v367
  // Predicated region
  $region18: #{_forward_core.1} parent=0 // pred_check
    _
  $region19: #{_forward_core.1} parent=0 // pred_check_branch
    %374 = sbr.rel (0) target = $region21
  $region20: #{_forward_core.1} parent=0 // pred_region
    _
  $region21: #{_forward_core.1} parent=0 // pred_fallthru
    _
  // Predicated region
  $region22: #{_forward_core.1} parent=0 // pred_check
    _
  $region23: #{_forward_core.1} parent=0 // pred_check_branch
    %376 = sbr.rel (0) target = $region25
  $region24: #{_forward_core.1} parent=0 // pred_region
    _
  $region25: #{_forward_core.1} parent=0 // pred_fallthru
    _

</llo_original>
